<compile_context>
chip_gen: v7x
topology: tpu7x:2x2x1
jax: 0.10.0
libtpu: 0.0.40
codegen_flags: <defaults>
</compile_context>

<pallas_src>
import jax
import jax.numpy as jnp
from jax.experimental import pallas as pl
from jax.experimental.pallas import tpu as pltpu


def _round_up(n, m):
    return ((n + m - 1) // m) * m


# --------------------------------------------------------------------------
# Pass 1: channel gate + gate-folded permutation matrix
# --------------------------------------------------------------------------
def _make_gate_kernel(true_l):
    inv_l = 1.0 / float(true_l)

    def gate_kernel(x_ref, w1_ref, w2_ref, perm_ref, acc_ref):
        # x_ref  : (TB, C, TL)  streaming dtype (bf16 or f32)
        # w1_ref : (Cm, C)      torch fc[0].weight  (f32)
        # w2_ref : (C, Cm)      torch fc[2].weight  (f32)
        # perm_ref : (TB, C, C) f32, written on the last L tile only
        # acc_ref  : (TB, C)    f32 running channel sums (scratch)
        j = pl.program_id(1)

        @pl.when(j == 0)
        def _init():
            acc_ref[...] = jnp.zeros_like(acc_ref)

        # Accumulate partial channel sums in f32 (padded L columns are zero).
        acc_ref[...] += jnp.sum(x_ref[...].astype(jnp.float32), axis=-1)

        @pl.when(j == pl.num_programs(1) - 1)
        def _finalize():
            avg = acc_ref[...] * inv_l                                   # (TB, C)

            # Tiny FCs in exact f32 (VPU multiply + XLU lane reduce) against the
            # torch-layout weights; avoids default-precision MXU rounding on the
            # gate so the argsort decision tracks an f32 reference exactly.
            w1 = w1_ref[...]                                             # (Cm, C)
            w2 = w2_ref[...]                                             # (C, Cm)
            h = jnp.sum(avg[:, None, :] * w1[None, :, :], axis=-1)       # (TB, Cm)
            h = h * jax.nn.sigmoid(h)                                    # SiLU
            fc = jax.nn.sigmoid(
                jnp.sum(h[:, None, :] * w2[None, :, :], axis=-1))        # (TB, C)

            # Stable ascending rank:
            # rank[c] = #{c' : fc[c'] < fc[c]  or  (fc[c'] == fc[c] and c' < c)}
            a = fc[:, :, None]                                           # fc[c]
            b = fc[:, None, :]                                           # fc[c']
            tb, c_dim = fc.shape
            ci = jax.lax.broadcasted_iota(jnp.int32, (tb, c_dim, c_dim), 1)  # c (== out row i)
            cj = jax.lax.broadcasted_iota(jnp.int32, (tb, c_dim, c_dim), 2)  # c'
            before = (b < a) | ((b == a) & (cj < ci))
            rank = jnp.sum(before.astype(jnp.int32), axis=2)             # (TB, C)

            # Gate folded into the one-hot permutation:
            #   perm[b, i, c] = fc[b, c]  iff  rank[b, c] == i
            perm_ref[...] = jnp.where(ci == rank[:, None, :], b, 0.0
                                      ).astype(perm_ref.dtype)

    return gate_kernel


# --------------------------------------------------------------------------
# Pass 2: streaming apply  --  out tile = perm_gated @ x tile
# --------------------------------------------------------------------------
def _apply_kernel(perm_ref, x_ref, o_ref):
    xv = x_ref[...]
    pm = perm_ref[...].astype(xv.dtype)
    if pm.ndim == 2:
        # TB == 1: leading block dim squeezed -> clean 2-D MXU dot.
        out = jnp.dot(pm, xv, preferred_element_type=jnp.float32)
    else:
        # Batched over the TB block dim: (TB,C,C) x (TB,C,TL) -> (TB,C,TL).
        out = jax.lax.dot_general(
            pm, xv,
            dimension_numbers=(((2,), (1,)), ((0,), (0,))),
            preferred_element_type=jnp.float32)
    o_ref[...] = out.astype(o_ref.dtype)


# --------------------------------------------------------------------------
# Wrapper
# --------------------------------------------------------------------------
def arnet(x, w1, w2, *, tb=None, tl=None, io_dtype=jnp.bfloat16,
          x_buffers=None, vmem_limit_bytes=None):
    """ARNet forward.

    x  : (B, C, L)
    w1 : (Cm, C)  torch fc[0].weight  (Linear(C, Cm, bias=False))
    w2 : (C, Cm)  torch fc[2].weight  (Linear(Cm, C, bias=False))

    io_dtype : streaming dtype for x / out (default bf16 -> halves HBM traffic;
               accumulation and the gate stay f32).  Weights stay f32 (tiny).
    tb, tl   : batch / length tile sizes.  Size against VMEM per generation:
               keep ~2(buffers) x 2(in+out) x TB*C*TL*itemsize well under the
               scoped limit (v7x: 64 MiB physical / 32 MiB scoped default;
               v5e/v6e: 128 MiB physical, raise vmem_limit_bytes for big tiles).
    x_buffers: optional deeper input pipelining (pl.Buffered(n)) for the apply
               pass -- useful on v5e where exposed DMA latency hurts most.
    """
    B, C, L = x.shape
    Cm = w1.shape[0]
    assert w1.shape == (Cm, C) and w2.shape == (C, Cm)

    x_io = x.astype(io_dtype)
    w1 = w1.astype(jnp.float32)
    w2 = w2.astype(jnp.float32)

    # ---- tile selection -----------------------------------------------------
    if tl is None:
        tl = min(_round_up(L, 128), 512)
    tl = _round_up(tl, 128)                 # lane-dense output stores
    lp = _round_up(L, tl)

    itemsize = jnp.dtype(io_dtype).itemsize
    if tb is None:
        # Target ~1 MiB x blocks so the ~0.35 us per-grid-step overhead and
        # short DMAs are amortized; capped by B.
        tb = max(1, min(B, (1 << 20) // max(C * tl * itemsize, 1)))
    bp = _round_up(B, tb)

    # Zero padding: padded L columns do not change channel sums (we divide by
    # the true L); padded batch rows are sliced off below.
    if (bp, lp) != (B, L):
        x_io = jnp.pad(x_io, ((0, bp - B), (0, 0), (0, lp - L)))

    nb, nl = bp // tb, lp // tl

    # ---- pass 1: gate + permutation (tiny (B, C, C) output) -----------------
    perm = pl.pallas_call(
        _make_gate_kernel(L),
        out_shape=jax.ShapeDtypeStruct((bp, C, C), jnp.float32),
        grid=(nb, nl),
        in_specs=[
            pl.BlockSpec((tb, C, tl), lambda i, j: (i, 0, j)),
            pl.BlockSpec((Cm, C), lambda i, j: (0, 0)),
            pl.BlockSpec((C, Cm), lambda i, j: (0, 0)),
        ],
        out_specs=pl.BlockSpec((tb, C, C), lambda i, j: (i, 0, 0)),
        scratch_shapes=[pltpu.VMEM((tb, C), jnp.float32)],
        compiler_params=pltpu.CompilerParams(
            dimension_semantics=("parallel", "arbitrary"),
            vmem_limit_bytes=vmem_limit_bytes,
        ),
    )(x_io, w1, w2)

    # ---- pass 2: streaming apply (both grid axes parallel) ------------------
    lead = None if tb == 1 else tb          # None == squeezed leading block dim
    x_spec_kwargs = {}
    if x_buffers is not None and x_buffers != 2:
        x_spec_kwargs["pipeline_mode"] = pl.Buffered(x_buffers)

    out = pl.pallas_call(
        _apply_kernel,
        out_shape=jax.ShapeDtypeStruct((bp, C, lp), io_dtype),
        grid=(nb, nl),
        in_specs=[
            pl.BlockSpec((lead, C, C), lambda i, j: (i, 0, 0)),
            pl.BlockSpec((lead, C, tl), lambda i, j: (i, 0, j), **x_spec_kwargs),
        ],
        out_specs=pl.BlockSpec((lead, C, tl), lambda i, j: (i, 0, j)),
        compiler_params=pltpu.CompilerParams(
            dimension_semantics=("parallel", "parallel"),
            vmem_limit_bytes=vmem_limit_bytes,
        ),
    )(perm, x_io)

    return out[:B, :, :L]


# --------------------------------------------------------------------------
# Pure-JAX reference of the PyTorch forward (f32, stable ascending argsort).
# HIGHEST precision on the tiny FCs matches PyTorch's exact-f32 matmuls.
# --------------------------------------------------------------------------
def arnet_reference(x, w1, w2):
    avg = jnp.mean(x, axis=-1)                                         # (B, C)
    h = jnp.dot(avg, w1.T, precision=jax.lax.Precision.HIGHEST)
    h = h * jax.nn.sigmoid(h)                                          # SiLU
    fc = jax.nn.sigmoid(jnp.dot(h, w2.T, precision=jax.lax.Precision.HIGHEST))
    xs = x * fc[:, :, None]
    idx = jnp.argsort(fc, axis=1)                                      # ascending, stable
    return jnp.take_along_axis(xs, idx[:, :, None], axis=1)


if __name__ == "__main__":
    key = jax.random.PRNGKey(0)
    kx, k1, k2 = jax.random.split(key, 3)

    # Small shapes consistent with the module; L is a multiple of 128 so output
    # stores are lane-dense without padding.
    B, C, L, ratio = 2, 8, 256, 1
    Cm = C // ratio
    x = jax.random.normal(kx, (B, C, L), jnp.float32)
    w1 = 0.3 * jax.random.normal(k1, (Cm, C), jnp.float32)  # torch Linear(C, Cm, bias=False).weight
    w2 = 0.3 * jax.random.normal(k2, (C, Cm), jnp.float32)  # torch Linear(Cm, C, bias=False).weight

    # ---- default path: bf16 streaming I/O, TB-batched blocks ---------------
    out = jax.block_until_ready(arnet(x, w1, w2))
    assert out.shape == (B, C, L), out.shape
    assert out.dtype == jnp.bfloat16
    assert bool(jnp.all(jnp.isfinite(out.astype(jnp.float32))))

    # Compare against the reference evaluated on the bf16-rounded stream so the
    # gate (and hence the argsort permutation) is derived from identical
    # values; the remaining error is only bf16 rounding of the applied gate.
    x_rounded = x.astype(jnp.bfloat16).astype(jnp.float32)
    ref_bf16 = arnet_reference(x_rounded, w1, w2)
    err = float(jnp.max(jnp.abs(out.astype(jnp.float32) - ref_bf16)))
    assert err < 5e-2, err

    # ---- float32 I/O path; tb=1 exercises the squeezed-dim 2-D dot,
    #      tl=128 exercises multi-tile accumulation of the channel mean -------
    out32 = jax.block_until_ready(
        arnet(x, w1, w2, io_dtype=jnp.float32, tb=1, tl=128))
    ref32 = arnet_reference(x, w1, w2)
    err32 = float(jnp.max(jnp.abs(out32 - ref32)))
    assert err32 < 5e-2, err32

    print("KERNEL_OK")
</pallas_src>

<mosaic_0001>
module attributes {stable_mosaic.version = 11 : i64} {
  func.func @gate_kernel(%arg0: i32, %arg1: i32, %arg2: memref<2x8x256xbf16, #tpu.memory_space<vmem>>, %arg3: memref<8x8xf32, #tpu.memory_space<vmem>>, %arg4: memref<8x8xf32, #tpu.memory_space<vmem>>, %arg5: memref<2x8x8xf32, #tpu.memory_space<vmem>>, %arg6: memref<2x8xf32, #tpu.memory_space<vmem>>) attributes {dimension_semantics = [#tpu.dimension_semantics<parallel>, #tpu.dimension_semantics<arbitrary>], iteration_bounds = array<i64: 1, 1>, scalar_prefetch = 0 : i64, scratch_operands = 1 : i64, tpu.core_type = #tpu.core_type<tc>, window_params = [{transform_indices = @transform_0, window_bounds = array<i64: 2, 8, 256>}, {pipeline_mode = #tpu.pipeline_mode<synchronous>, transform_indices = @transform_1, window_bounds = array<i64: 8, 8>}, {pipeline_mode = #tpu.pipeline_mode<synchronous>, transform_indices = @transform_2, window_bounds = array<i64: 8, 8>}, {transform_indices = @transform_3, window_bounds = array<i64: 2, 8, 8>}]} {
    %c0_i32 = arith.constant 0 : i32
    %0 = arith.cmpi eq, %arg1, %c0_i32 : i32
    %1 = arith.extui %0 : i1 to i32
    %c0_i32_0 = arith.constant 0 : i32
    %2 = arith.cmpi ne, %1, %c0_i32_0 : i32
    scf.if %2 {
      %cst_9 = arith.constant 0.000000e+00 : f32
      %12 = vector.broadcast %cst_9 : f32 to vector<2x8xf32>
      %c0_10 = arith.constant 0 : index
      %c0_11 = arith.constant 0 : index
      %13 = vector.load %arg6[%c0_10, %c0_11] : memref<2x8xf32, #tpu.memory_space<vmem>>, vector<2x8xf32>
      tpu.vector_store %arg6[%c0_10, %c0_11], %12 {strides = array<i32>} : memref<2x8xf32, #tpu.memory_space<vmem>>, vector<2x8xf32>,
    } else {
    }
    %c0 = arith.constant 0 : index
    %c0_1 = arith.constant 0 : index
    %3 = vector.load %arg6[%c0, %c0_1] : memref<2x8xf32, #tpu.memory_space<vmem>>, vector<2x8xf32>
    %c0_2 = arith.constant 0 : index
    %c0_3 = arith.constant 0 : index
    %c0_4 = arith.constant 0 : index
    %4 = vector.load %arg2[%c0_2, %c0_3, %c0_4] : memref<2x8x256xbf16, #tpu.memory_space<vmem>>, vector<2x8x256xbf16>
    %5 = arith.extf %4 : vector<2x8x256xbf16> to vector<2x8x256xf32>
    %cst = arith.constant dense<0.000000e+00> : vector<2x8xf32>
    %6 = vector.multi_reduction <add>, %5, %cst [2] : vector<2x8x256xf32> to vector<2x8xf32>
    %7 = arith.addf %3, %6 : vector<2x8xf32>
    %c0_5 = arith.constant 0 : index
    %c0_6 = arith.constant 0 : index
    %8 = vector.load %arg6[%c0_5, %c0_6] : memref<2x8xf32, #tpu.memory_space<vmem>>, vector<2x8xf32>
    tpu.vector_store %arg6[%c0_5, %c0_6], %7 {strides = array<i32>} : memref<2x8xf32, #tpu.memory_space<vmem>>, vector<2x8xf32>,
    %c0_i32_7 = arith.constant 0 : i32
    %9 = arith.cmpi eq, %arg1, %c0_i32_7 : i32
    %10 = arith.extui %9 : i1 to i32
    %c0_i32_8 = arith.constant 0 : i32
    %11 = arith.cmpi ne, %10, %c0_i32_8 : i32
    scf.if %11 {
      %c0_9 = arith.constant 0 : index
      %c0_10 = arith.constant 0 : index
      %12 = vector.load %arg6[%c0_9, %c0_10] : memref<2x8xf32, #tpu.memory_space<vmem>>, vector<2x8xf32>
      %cst_11 = arith.constant 3.906250e-03 : f32
      %13 = vector.broadcast %cst_11 : f32 to vector<2x8xf32>
      %14 = arith.mulf %12, %13 : vector<2x8xf32>
      %c0_12 = arith.constant 0 : index
      %c0_13 = arith.constant 0 : index
      %15 = vector.load %arg3[%c0_12, %c0_13] : memref<8x8xf32, #tpu.memory_space<vmem>>, vector<8x8xf32>
      %c0_14 = arith.constant 0 : index
      %c0_15 = arith.constant 0 : index
      %16 = vector.load %arg4[%c0_14, %c0_15] : memref<8x8xf32, #tpu.memory_space<vmem>>, vector<8x8xf32>
      %17 = vector.shape_cast %14 : vector<2x8xf32> to vector<2x1x8xf32>
      %18 = vector.shape_cast %15 : vector<8x8xf32> to vector<1x8x8xf32>
      %19 = vector.broadcast %17 : vector<2x1x8xf32> to vector<2x8x8xf32>
      %20 = vector.broadcast %18 : vector<1x8x8xf32> to vector<2x8x8xf32>
      %21 = arith.mulf %19, %20 : vector<2x8x8xf32>
      %cst_16 = arith.constant dense<0.000000e+00> : vector<2x8xf32>
      %22 = vector.multi_reduction <add>, %21, %cst_16 [2] : vector<2x8x8xf32> to vector<2x8xf32>
      %23 = arith.negf %22 : vector<2x8xf32>
      %24 = math.exp %23 : vector<2x8xf32>
      %cst_17 = arith.constant 1.000000e+00 : f32
      %25 = vector.broadcast %cst_17 : f32 to vector<2x8xf32>
      %26 = arith.addf %25, %24 : vector<2x8xf32>
      %27 = arith.divf %25, %26 : vector<2x8xf32>
      %28 = arith.mulf %22, %27 : vector<2x8xf32>
      %29 = vector.shape_cast %28 : vector<2x8xf32> to vector<2x1x8xf32>
      %30 = vector.shape_cast %16 : vector<8x8xf32> to vector<1x8x8xf32>
      %31 = vector.broadcast %29 : vector<2x1x8xf32> to vector<2x8x8xf32>
      %32 = vector.broadcast %30 : vector<1x8x8xf32> to vector<2x8x8xf32>
      %33 = arith.mulf %31, %32 : vector<2x8x8xf32>
      %cst_18 = arith.constant dense<0.000000e+00> : vector<2x8xf32>
      %34 = vector.multi_reduction <add>, %33, %cst_18 [2] : vector<2x8x8xf32> to vector<2x8xf32>
      %35 = arith.negf %34 : vector<2x8xf32>
      %36 = math.exp %35 : vector<2x8xf32>
      %cst_19 = arith.constant 1.000000e+00 : f32
      %37 = vector.broadcast %cst_19 : f32 to vector<2x8xf32>
      %38 = arith.addf %37, %36 : vector<2x8xf32>
      %39 = arith.divf %37, %38 : vector<2x8xf32>
      %40 = vector.shape_cast %39 : vector<2x8xf32> to vector<2x8x1xf32>
      %41 = vector.shape_cast %39 : vector<2x8xf32> to vector<2x1x8xf32>
      %42 = tpu.iota {dimensions = array<i32: 1>} : vector<2x8x8xi32>
      %43 = tpu.iota {dimensions = array<i32: 2>} : vector<2x8x8xi32>
      %44 = vector.broadcast %41 : vector<2x1x8xf32> to vector<2x8x8xf32>
      %45 = vector.broadcast %40 : vector<2x8x1xf32> to vector<2x8x8xf32>
      %46 = arith.cmpf olt, %44, %45 : vector<2x8x8xf32>
      %47 = vector.broadcast %41 : vector<2x1x8xf32> to vector<2x8x8xf32>
      %48 = vector.broadcast %40 : vector<2x8x1xf32> to vector<2x8x8xf32>
      %49 = arith.cmpf oeq, %47, %48 : vector<2x8x8xf32>
      %50 = arith.cmpi slt, %43, %42 : vector<2x8x8xi32>
      %51 = arith.andi %49, %50 : vector<2x8x8xi1>
      %52 = arith.ori %46, %51 : vector<2x8x8xi1>
      %53 = arith.extui %52 : vector<2x8x8xi1> to vector<2x8x8xi32>
      %cst_20 = arith.constant dense<0> : vector<2x8xi32>
      %54 = vector.multi_reduction <add>, %53, %cst_20 [2] : vector<2x8x8xi32> to vector<2x8xi32>
      %55 = vector.shape_cast %54 : vector<2x8xi32> to vector<2x1x8xi32>
      %56 = vector.broadcast %55 : vector<2x1x8xi32> to vector<2x8x8xi32>
      %57 = arith.cmpi eq, %42, %56 : vector<2x8x8xi32>
      %cst_21 = arith.constant 0.000000e+00 : f32
      %58 = vector.shape_cast %41 : vector<2x1x8xf32> to vector<2x1x8xf32>
      %59 = vector.broadcast %58 : vector<2x1x8xf32> to vector<2x8x8xf32>
      %60 = vector.broadcast %cst_21 : f32 to vector<2x8x8xf32>
      %61 = arith.select %57, %59, %60 : vector<2x8x8xi1>, vector<2x8x8xf32>
      %c0_22 = arith.constant 0 : index
      %c0_23 = arith.constant 0 : index
      %c0_24 = arith.constant 0 : index
      %62 = vector.load %arg5[%c0_22, %c0_23, %c0_24] : memref<2x8x8xf32, #tpu.memory_space<vmem>>, vector<2x8x8xf32>
      tpu.vector_store %arg5[%c0_22, %c0_23, %c0_24], %61 {strides = array<i32>} : memref<2x8x8xf32, #tpu.memory_space<vmem>>, vector<2x8x8xf32>,
    } else {
    }
    return
  }
  func.func @transform_0(%arg0: i32, %arg1: i32) -> (i32, i32, i32) {
    %c0_i32 = arith.constant 0 : i32
    %c0_i32_0 = arith.constant 0 : i32
    return %arg0, %c0_i32, %arg1 : i32, i32, i32
  }
  func.func @transform_1(%arg0: i32, %arg1: i32) -> (i32, i32) {
    %c0_i32 = arith.constant 0 : i32
    %c0_i32_0 = arith.constant 0 : i32
    %c0_i32_1 = arith.constant 0 : i32
    return %c0_i32, %c0_i32_0 : i32, i32
  }
  func.func @transform_2(%arg0: i32, %arg1: i32) -> (i32, i32) {
    %c0_i32 = arith.constant 0 : i32
    %c0_i32_0 = arith.constant 0 : i32
    %c0_i32_1 = arith.constant 0 : i32
    return %c0_i32, %c0_i32_0 : i32, i32
  }
  func.func @transform_3(%arg0: i32, %arg1: i32) -> (i32, i32, i32) {
    %c0_i32 = arith.constant 0 : i32
    %c0_i32_0 = arith.constant 0 : i32
    %c0_i32_1 = arith.constant 0 : i32
    return %arg0, %c0_i32, %c0_i32_0 : i32, i32, i32
  }
}

</mosaic_0001>

<llo_original>
// kernel: tpu_custom_call.1
$region0: #{tpu_custom_call.1}
  #allocation0 [shape = 'u32[]', space=smem, size = 0x4, offset = 0x4, fixed_abs, tag = 'smem constant byte address 0x4 - core index']
  #allocation1 [shape = 'u32[144,128]{1,0:T(1,128)}', space=vmem, size = 0x12000, scoped, tag = 'internal scratch']
  #allocation2 [shape = 'f32[2,8]{1,0:T(2,128)}', space=vmem, size = 0x400, scoped, tag = 'scratch operand']
  %s0 = inlined_call_operand.hbm [shape: bf16[2,8,256], index: 0, kind: input, shape index: {}]
  %s1 = inlined_call_operand.hbm [shape: f32[8,8], index: 1, kind: input, shape index: {}]
  %s2 = inlined_call_operand.hbm [shape: f32[8,8], index: 2, kind: input, shape index: {}]
  %s3 = inlined_call_operand.hbm [shape: f32[2,8,8], index: 3, kind: output, shape index: {}]
  %s4 = sld [smem:[#allocation0]]
  $region42: #{tpu_custom_call.1} parent=0
    _
  %s6 = ssub.s32 1, %s4
  %s7 = scalar_select 0, %s6, %s4
  $region1: #{tpu_custom_call.1} parent=0
    #allocation3 [shape = 'u8[8192]{0}', space=vmem, size = 0x2000, scoped, tag = 'input window, operand 0, single buffered']
    #allocation4 [shape = 's32[1]{0}', space=sflag, size = 0x4, scoped, tag = 'scoped memory for tpu_custom_call.1']
    #allocation5 [shape = 's32[1]{0}', space=sflag, size = 0x4, scoped, tag = 'scoped memory for tpu_custom_call.1']
    #allocation6 [shape = 'u8[4096]{0}', space=vmem, size = 0x1000, scoped, tag = 'input window, operand 1, single buffered']
    #allocation7 [shape = 's32[1]{0}', space=sflag, size = 0x4, scoped, tag = 'scoped memory for tpu_custom_call.1']
    #allocation8 [shape = 'u8[4096]{0}', space=vmem, size = 0x1000, scoped, tag = 'input window, operand 2, single buffered']
    #allocation9 [shape = 'u8[8192]{0}', space=vmem, size = 0x2000, scoped, tag = 'output window, operand 0, single buffered']
    %8 = vsyncpa [#allocation4], 0
    %9 = vsyncpa [#allocation7], 0
    %10 = vsyncpa [#allocation5], 0
    // Predicated region
    $region2: #{tpu_custom_call.1} parent=1 // pred_check
      _
    $region3: #{tpu_custom_call.1} parent=1 // pred_check_branch
      %12 = sbr.rel (0) target = $region5
    $region4: #{tpu_custom_call.1} parent=1 // pred_region
      %s14 = ssub.s32 256, 256
      %15 = vsyncadd [#allocation4], %s14
      %s16 = sshll.u32 [#allocation3], 4
      %s17 = int_to_ptr.vmem [resolvable:$true] %s16
      %22 = dma.hbm_to_vmem [thread:$0]  %s0, 256, %s17, [#allocation4], 128, 128, 8
    $region5: #{tpu_custom_call.1} parent=1 // pred_fallthru
      _
    // Predicated region
    $region6: #{tpu_custom_call.1} parent=1 // pred_check
      _
    $region7: #{tpu_custom_call.1} parent=1 // pred_check_branch
      %24 = sbr.rel (0) target = $region9
    $region8: #{tpu_custom_call.1} parent=1 // pred_region
      %s26 = ssub.s32 128, 128
      %27 = vsyncadd [#allocation7], %s26
      %s29 = sshll.u32 [#allocation6], 4
      %s30 = int_to_ptr.vmem [resolvable:$true] %s29
      %32 = dma.hbm_to_vmem [thread:$0]  %s1, 128, %s30, [#allocation7]
    $region9: #{tpu_custom_call.1} parent=1 // pred_fallthru
      _
    // Predicated region
    $region10: #{tpu_custom_call.1} parent=1 // pred_check
      _
    $region11: #{tpu_custom_call.1} parent=1 // pred_check_branch
      %34 = sbr.rel (0) target = $region13
    $region12: #{tpu_custom_call.1} parent=1 // pred_region
      %s36 = ssub.s32 128, 128
      %37 = vsyncadd [#allocation7], %s36
      %s39 = sshll.u32 [#allocation8], 4
      %s40 = int_to_ptr.vmem [resolvable:$true] %s39
      %42 = dma.hbm_to_vmem [thread:$0]  %s2, 128, %s40, [#allocation7]
    $region13: #{tpu_custom_call.1} parent=1 // pred_fallthru
      _
    // Predicated region
    $region14: #{tpu_custom_call.1} parent=1 // pred_check
      _
    $region15: #{tpu_custom_call.1} parent=1 // pred_check_branch
      %44 = sbr.rel (0) target = $region17
    $region16: #{tpu_custom_call.1} parent=1 // pred_region
      %45 = dma.done [#allocation4], 256
    $region17: #{tpu_custom_call.1} parent=1 // pred_fallthru
      _
    // Predicated region
    $region18: #{tpu_custom_call.1} parent=1 // pred_check
      _
    $region19: #{tpu_custom_call.1} parent=1 // pred_check_branch
      %47 = sbr.rel (0) target = $region21
    $region20: #{tpu_custom_call.1} parent=1 // pred_region
      %48 = dma.done [#allocation7], 128
    $region21: #{tpu_custom_call.1} parent=1 // pred_fallthru
      _
    // Predicated region
    $region22: #{tpu_custom_call.1} parent=1 // pred_check
      _
    $region23: #{tpu_custom_call.1} parent=1 // pred_check_branch
      %50 = sbr.rel (0) target = $region25
    $region24: #{tpu_custom_call.1} parent=1 // pred_region
      %51 = dma.done [#allocation7], 128
    $region25: #{tpu_custom_call.1} parent=1 // pred_fallthru
      _
    %p52 = scmp.eq.s32.totalorder 0, 0
    // Predicated region
    $region26: #{tpu_custom_call.1} parent=1 // pred_check
      %p53 = pneg %p52
    $region27: #{tpu_custom_call.1} parent=1 // pred_check_branch
      %55 = sbr.rel (%p53) target = $region29
    $region28: #{tpu_custom_call.1} parent=1 // pred_region
      %vm56 = vcmask 58368
      %57 = vst.msk [vmem:[#allocation2] sm:$0x3] %vm56, 0.0
    $region29: #{tpu_custom_call.1} parent=1 // pred_fallthru
      _
    %v58 = vld [vmem:[#allocation2] sm:$0x3]
    %v59 = vld [vmem:[#allocation3] sm:$0xff]
    %v60 = vld [vmem:[#allocation3 + $0x8] sm:$0xff]
    %v61 = vunpack.c.l.bf16 %v59
    %v62 = vunpack.c.h.bf16 %v59
    %v63 = vunpack.c.l.bf16 %v60
    %v64 = vunpack.c.h.bf16 %v60
    %v65 = vadd.f32 %v61, %v62
    %66 = vadd.xlane.f32.xlu0 %v65
    %v67 = vpop.xlane.xlu0 %66
    %v68 = vadd.f32 %v63, %v64
    %69 = vadd.xlane.f32.xlu0 %v68
    %v70 = vpop.xlane.xlu0 %69
    %v73 = vlaneseq
    %v74 = vand.u32 %v73, 127
    %v75 = vlaneseq
    %v76 = vshrl.u32 %v75, 7
    %v77 = vsub.s32 %v74, %v76
    %v78 = vrot.slane %v67, %v77
    %v79 = vlaneseq
    %v80 = vshrl.u32 %v79, 7
    %v81 = vsub.s32 %v74, %v80
    %v82 = vrot.slane %v70, %v81
    %vm83 = vcmask 1041409
    %v84 = vsel %vm83, %v82, %v78
    %v86 = vadd.f32 %v58, %v84
    %vm87 = vcmask 58368
    %88 = vst.msk [vmem:[#allocation2] sm:$0x3] %vm87, %v86
    // Predicated region
    $region30: #{tpu_custom_call.1} parent=1 // pred_check
      %p89 = pneg %p52
    $region31: #{tpu_custom_call.1} parent=1 // pred_check_branch
      %91 = sbr.rel (%p89) target = $region33
    $region32: #{tpu_custom_call.1} parent=1 // pred_region
      %v92 = vld [vmem:[#allocation2] sm:$0x3]
      %v93 = vmul.f32 %v92, 0.00390625
      %v94 = vld [vmem:[#allocation6] sm:$0xff]
      %v95 = vld [vmem:[#allocation8] sm:$0xff]
      %v98 = vunpack.c.l.s4 1966171168
      %v99 = vunpack.c.0.s8 %v98
      %v100 = vlaneseq
      %v101 = vshrl.u32 %v100, 7
      %v102 = vsub.s32 %v99, %v101
      %v103 = vrot.slane %v93, %v102
      %v104 = vcombine.high %v103, %v103
      %v106 = vunpack.c.l.s4 1966171168
      %v107 = vunpack.c.0.s8 %v106
      %v108 = vlaneseq
      %v109 = vshrl.u32 %v108, 7
      %v110 = vsub.s32 %v107, %v109
      %v111 = vrot.slane %v103, %v110
      %v113 = vunpack.c.l.s4 1966171168
      %v114 = vunpack.c.0.s8 %v113
      %v115 = vlaneseq
      %v116 = vshrl.u32 %v115, 7
      %v117 = vsub.s32 %v114, %v116
      %v118 = vrot.slane %v104, %v117
      %v119 = vlaneseq
      %v120 = vshrl.u32 %v119, 7
      %v121 = vsub.s32 0, %v120
      %v122 = vrot.slane %v111, %v121
      %v123 = vlaneseq
      %v124 = vshrl.u32 %v123, 7
      %v125 = vsub.s32 0, %v124
      %v126 = vrot.slane %v118, %v125
      %v129 = vmul.f32 %v122, %v94
      %v130 = vmul.f32 %v126, %v94
      %vm131 = vcmask 64512
      %v132 = vsel %vm131, %v129, 0.0
      %133 = vadd.xlane.f32.xlu0 %v132
      %v134 = vpop.xlane.xlu0 %133
      %v135 = vsel %vm131, %v130, 0.0
      %136 = vadd.xlane.f32.xlu0 %v135
      %v137 = vpop.xlane.xlu0 %136
      %v138 = vxor.u32 %v134, 2147483648
      %v139 = vxor.u32 %v137, 2147483648
      %v140 = vmul.f32 %v138, 1.442695
      %v141 = vpow.pop %v140
      %v142 = vmul.f32 %v139, 1.442695
      %v143 = vpow.pop %v142
      %v144 = vadd.f32 %v141, 1.0
      %v145 = vadd.f32 %v143, 1.0
      %v146 = vrcp.pop %v144
      %v147 = vmul.f32 1.0, %v146
      %v148 = vrcp.pop %v145
      %v149 = vmul.f32 1.0, %v148
      %v150 = vmul.f32 %v134, %v147
      %v151 = vmul.f32 %v137, %v149
      %v153 = vlaneseq
      %v154 = vshrl.u32 %v153, 7
      %v155 = vsub.s32 0, %v154
      %v156 = vrot.slane %v95, %v155
      %158 = vbcast.lane.b32.xlu0 %v156, 256
      %v159 = vpop.permute.xlu0 %158
      %v160 = vlaneseq
      %v161 = vshrl.u32 %v160, 7
      %v162 = vsub.s32 1, %v161
      %v163 = vrot.slane %v95, %v162
      %165 = vbcast.lane.b32.xlu0 %v163, 256
      %v166 = vpop.permute.xlu0 %165
      %v167 = vlaneseq
      %v168 = vshrl.u32 %v167, 7
      %v169 = vsub.s32 2, %v168
      %v170 = vrot.slane %v95, %v169
      %172 = vbcast.lane.b32.xlu0 %v170, 256
      %v173 = vpop.permute.xlu0 %172
      %v174 = vlaneseq
      %v175 = vshrl.u32 %v174, 7
      %v176 = vsub.s32 3, %v175
      %v177 = vrot.slane %v95, %v176
      %179 = vbcast.lane.b32.xlu0 %v177, 256
      %v180 = vpop.permute.xlu0 %179
      %v181 = vlaneseq
      %v182 = vshrl.u32 %v181, 7
      %v183 = vsub.s32 4, %v182
      %v184 = vrot.slane %v95, %v183
      %186 = vbcast.lane.b32.xlu0 %v184, 256
      %v187 = vpop.permute.xlu0 %186
      %v188 = vlaneseq
      %v189 = vshrl.u32 %v188, 7
      %v190 = vsub.s32 5, %v189
      %v191 = vrot.slane %v95, %v190
      %193 = vbcast.lane.b32.xlu0 %v191, 256
      %v194 = vpop.permute.xlu0 %193
      %v195 = vlaneseq
      %v196 = vshrl.u32 %v195, 7
      %v197 = vsub.s32 6, %v196
      %v198 = vrot.slane %v95, %v197
      %200 = vbcast.lane.b32.xlu0 %v198, 256
      %v201 = vpop.permute.xlu0 %200
      %v202 = vlaneseq
      %v203 = vshrl.u32 %v202, 7
      %v204 = vsub.s32 7, %v203
      %v205 = vrot.slane %v95, %v204
      %207 = vbcast.lane.b32.xlu0 %v205, 256
      %v208 = vpop.permute.xlu0 %207
      %v217 = vmul.f32 %v150, %v159
      %v218 = vmul.f32 %v150, %v166
      %v219 = vmul.f32 %v150, %v173
      %v220 = vmul.f32 %v150, %v180
      %v221 = vmul.f32 %v150, %v187
      %v222 = vmul.f32 %v150, %v194
      %v223 = vmul.f32 %v150, %v201
      %v224 = vmul.f32 %v150, %v208
      %v225 = vmul.f32 %v151, %v159
      %v226 = vmul.f32 %v151, %v166
      %v227 = vmul.f32 %v151, %v173
      %v228 = vmul.f32 %v151, %v180
      %v229 = vmul.f32 %v151, %v187
      %v230 = vmul.f32 %v151, %v194
      %v231 = vmul.f32 %v151, %v201
      %v232 = vmul.f32 %v151, %v208
      %249 = vset.pattern.permute.xlu0 0
      %250 = vperm.xlu0 %249, %v217
      %v251 = vpop.permute.xlu0 %250
      %252 = vset.pattern.permute.xlu0 0
      %253 = vperm.xlu0 %252, %v218
      %v254 = vpop.permute.xlu0 %253
      %255 = vset.pattern.permute.xlu0 0
      %256 = vperm.xlu0 %255, %v219
      %v257 = vpop.permute.xlu0 %256
      %258 = vset.pattern.permute.xlu0 0
      %259 = vperm.xlu0 %258, %v220
      %v260 = vpop.permute.xlu0 %259
      %261 = vset.pattern.permute.xlu0 0
      %262 = vperm.xlu0 %261, %v221
      %v263 = vpop.permute.xlu0 %262
      %264 = vset.pattern.permute.xlu0 0
      %265 = vperm.xlu0 %264, %v222
      %v266 = vpop.permute.xlu0 %265
      %267 = vset.pattern.permute.xlu0 0
      %268 = vperm.xlu0 %267, %v223
      %v269 = vpop.permute.xlu0 %268
      %270 = vset.pattern.permute.xlu0 0
      %271 = vperm.xlu0 %270, %v224
      %v272 = vpop.permute.xlu0 %271
      %273 = vset.pattern.permute.xlu0 0
      %274 = vperm.xlu0 %273, %v225
      %v275 = vpop.permute.xlu0 %274
      %276 = vset.pattern.permute.xlu0 0
      %277 = vperm.xlu0 %276, %v226
      %v278 = vpop.permute.xlu0 %277
      %279 = vset.pattern.permute.xlu0 0
      %280 = vperm.xlu0 %279, %v227
      %v281 = vpop.permute.xlu0 %280
      %282 = vset.pattern.permute.xlu0 0
      %283 = vperm.xlu0 %282, %v228
      %v284 = vpop.permute.xlu0 %283
      %285 = vset.pattern.permute.xlu0 0
      %286 = vperm.xlu0 %285, %v229
      %v287 = vpop.permute.xlu0 %286
      %288 = vset.pattern.permute.xlu0 0
      %289 = vperm.xlu0 %288, %v230
      %v290 = vpop.permute.xlu0 %289
      %291 = vset.pattern.permute.xlu0 0
      %292 = vperm.xlu0 %291, %v231
      %v293 = vpop.permute.xlu0 %292
      %294 = vset.pattern.permute.xlu0 0
      %295 = vperm.xlu0 %294, %v232
      %v296 = vpop.permute.xlu0 %295
      %v297 = vlaneseq
      %v298 = vshrl.u32 %v297, 7
      %v299 = vsub.s32 %v74, %v298
      %v300 = vrot.slane %v251, %v299
      %v301 = vlaneseq
      %v302 = vshrl.u32 %v301, 7
      %v303 = vsub.s32 %v74, %v302
      %v304 = vrot.slane %v254, %v303
      %v305 = vlaneseq
      %v306 = vshrl.u32 %v305, 7
      %v307 = vsub.s32 %v74, %v306
      %v308 = vrot.slane %v257, %v307
      %v309 = vlaneseq
      %v310 = vshrl.u32 %v309, 7
      %v311 = vsub.s32 %v74, %v310
      %v312 = vrot.slane %v260, %v311
      %v313 = vlaneseq
      %v314 = vshrl.u32 %v313, 7
      %v315 = vsub.s32 %v74, %v314
      %v316 = vrot.slane %v263, %v315
      %v317 = vlaneseq
      %v318 = vshrl.u32 %v317, 7
      %v319 = vsub.s32 %v74, %v318
      %v320 = vrot.slane %v266, %v319
      %v321 = vlaneseq
      %v322 = vshrl.u32 %v321, 7
      %v323 = vsub.s32 %v74, %v322
      %v324 = vrot.slane %v269, %v323
      %v325 = vlaneseq
      %v326 = vshrl.u32 %v325, 7
      %v327 = vsub.s32 %v74, %v326
      %v328 = vrot.slane %v272, %v327
      %v329 = vlaneseq
      %v330 = vshrl.u32 %v329, 7
      %v331 = vsub.s32 %v74, %v330
      %v332 = vrot.slane %v275, %v331
      %v333 = vlaneseq
      %v334 = vshrl.u32 %v333, 7
      %v335 = vsub.s32 %v74, %v334
      %v336 = vrot.slane %v278, %v335
      %v337 = vlaneseq
      %v338 = vshrl.u32 %v337, 7
      %v339 = vsub.s32 %v74, %v338
      %v340 = vrot.slane %v281, %v339
      %v341 = vlaneseq
      %v342 = vshrl.u32 %v341, 7
      %v343 = vsub.s32 %v74, %v342
      %v344 = vrot.slane %v284, %v343
      %v345 = vlaneseq
      %v346 = vshrl.u32 %v345, 7
      %v347 = vsub.s32 %v74, %v346
      %v348 = vrot.slane %v287, %v347
      %v349 = vlaneseq
      %v350 = vshrl.u32 %v349, 7
      %v351 = vsub.s32 %v74, %v350
      %v352 = vrot.slane %v290, %v351
      %v353 = vlaneseq
      %v354 = vshrl.u32 %v353, 7
      %v355 = vsub.s32 %v74, %v354
      %v356 = vrot.slane %v293, %v355
      %v357 = vlaneseq
      %v358 = vshrl.u32 %v357, 7
      %v359 = vsub.s32 %v74, %v358
      %v360 = vrot.slane %v296, %v359
      %v361 = vsel %vm83, %v304, %v300
      %vm362 = vcmask 1042434
      %v363 = vsel %vm362, %v308, %v361
      %vm364 = vcmask 1043459
      %v365 = vsel %vm364, %v312, %v363
      %vm366 = vcmask 1044484
      %v367 = vsel %vm366, %v316, %v365
      %vm368 = vcmask 1045509
      %v369 = vsel %vm368, %v320, %v367
      %vm370 = vcmask 1046534
      %v371 = vsel %vm370, %v324, %v369
      %vm372 = vcmask 1047559
      %v373 = vsel %vm372, %v328, %v371
      %v374 = vsel %vm83, %v336, %v332
      %v375 = vsel %vm362, %v340, %v374
      %v376 = vsel %vm364, %v344, %v375
      %v377 = vsel %vm366, %v348, %v376
      %v378 = vsel %vm368, %v352, %v377
      %v379 = vsel %vm370, %v356, %v378
      %v380 = vsel %vm372, %v360, %v379
      %v383 = vsel %vm131, %v373, 0.0
      %384 = vadd.xlane.f32.xlu0 %v383
      %v385 = vpop.xlane.xlu0 %384
      %v386 = vsel %vm131, %v380, 0.0
      %387 = vadd.xlane.f32.xlu0 %v386
      %v388 = vpop.xlane.xlu0 %387
      %v389 = vxor.u32 %v385, 2147483648
      %v390 = vxor.u32 %v388, 2147483648
      %v391 = vmul.f32 %v389, 1.442695
      %v392 = vpow.pop %v391
      %v393 = vmul.f32 %v390, 1.442695
      %v394 = vpow.pop %v393
      %v395 = vadd.f32 %v392, 1.0
      %v396 = vadd.f32 %v394, 1.0
      %v397 = vrcp.pop %v395
      %v398 = vmul.f32 1.0, %v397
      %v399 = vrcp.pop %v396
      %v400 = vmul.f32 1.0, %v399
      %v401 = vlaneseq
      %v402 = vshrl.u32 %v401, 7
      %v405 = vlaneseq
      %v406 = vshrl.u32 %v405, 7
      %v407 = vsub.s32 0, %v406
      %v408 = vrot.slane %v398, %v407
      %v409 = vlaneseq
      %v410 = vshrl.u32 %v409, 7
      %v411 = vsub.s32 1, %v410
      %v412 = vrot.slane %v398, %v411
      %v413 = vlaneseq
      %v414 = vshrl.u32 %v413, 7
      %v415 = vsub.s32 2, %v414
      %v416 = vrot.slane %v398, %v415
      %v417 = vlaneseq
      %v418 = vshrl.u32 %v417, 7
      %v419 = vsub.s32 3, %v418
      %v420 = vrot.slane %v398, %v419
      %v421 = vlaneseq
      %v422 = vshrl.u32 %v421, 7
      %v423 = vsub.s32 4, %v422
      %v424 = vrot.slane %v398, %v423
      %v425 = vlaneseq
      %v426 = vshrl.u32 %v425, 7
      %v427 = vsub.s32 5, %v426
      %v428 = vrot.slane %v398, %v427
      %v429 = vlaneseq
      %v430 = vshrl.u32 %v429, 7
      %v431 = vsub.s32 6, %v430
      %v432 = vrot.slane %v398, %v431
      %v433 = vlaneseq
      %v434 = vshrl.u32 %v433, 7
      %v435 = vsub.s32 7, %v434
      %v436 = vrot.slane %v398, %v435
      %v437 = vlaneseq
      %v438 = vshrl.u32 %v437, 7
      %v439 = vsub.s32 0, %v438
      %v440 = vrot.slane %v400, %v439
      %v441 = vlaneseq
      %v442 = vshrl.u32 %v441, 7
      %v443 = vsub.s32 1, %v442
      %v444 = vrot.slane %v400, %v443
      %v445 = vlaneseq
      %v446 = vshrl.u32 %v445, 7
      %v447 = vsub.s32 2, %v446
      %v448 = vrot.slane %v400, %v447
      %v449 = vlaneseq
      %v450 = vshrl.u32 %v449, 7
      %v451 = vsub.s32 3, %v450
      %v452 = vrot.slane %v400, %v451
      %v453 = vlaneseq
      %v454 = vshrl.u32 %v453, 7
      %v455 = vsub.s32 4, %v454
      %v456 = vrot.slane %v400, %v455
      %v457 = vlaneseq
      %v458 = vshrl.u32 %v457, 7
      %v459 = vsub.s32 5, %v458
      %v460 = vrot.slane %v400, %v459
      %v461 = vlaneseq
      %v462 = vshrl.u32 %v461, 7
      %v463 = vsub.s32 6, %v462
      %v464 = vrot.slane %v400, %v463
      %v465 = vlaneseq
      %v466 = vshrl.u32 %v465, 7
      %v467 = vsub.s32 7, %v466
      %v468 = vrot.slane %v400, %v467
      %vm485 = vcmp.lt.f32.partialorder %v398, %v408
      %vm486 = vcmp.lt.f32.partialorder %v398, %v412
      %vm487 = vcmp.lt.f32.partialorder %v398, %v416
      %vm488 = vcmp.lt.f32.partialorder %v398, %v420
      %vm489 = vcmp.lt.f32.partialorder %v398, %v424
      %vm490 = vcmp.lt.f32.partialorder %v398, %v428
      %vm491 = vcmp.lt.f32.partialorder %v398, %v432
      %vm492 = vcmp.lt.f32.partialorder %v398, %v436
      %vm493 = vcmp.lt.f32.partialorder %v400, %v440
      %vm494 = vcmp.lt.f32.partialorder %v400, %v444
      %vm495 = vcmp.lt.f32.partialorder %v400, %v448
      %vm496 = vcmp.lt.f32.partialorder %v400, %v452
      %vm497 = vcmp.lt.f32.partialorder %v400, %v456
      %vm498 = vcmp.lt.f32.partialorder %v400, %v460
      %vm499 = vcmp.lt.f32.partialorder %v400, %v464
      %vm500 = vcmp.lt.f32.partialorder %v400, %v468
      %vm501 = vcmp.eq.f32.partialorder %v398, %v408
      %vm502 = vcmp.eq.f32.partialorder %v398, %v412
      %vm503 = vcmp.eq.f32.partialorder %v398, %v416
      %vm504 = vcmp.eq.f32.partialorder %v398, %v420
      %vm505 = vcmp.eq.f32.partialorder %v398, %v424
      %vm506 = vcmp.eq.f32.partialorder %v398, %v428
      %vm507 = vcmp.eq.f32.partialorder %v398, %v432
      %vm508 = vcmp.eq.f32.partialorder %v398, %v436
      %vm509 = vcmp.eq.f32.partialorder %v400, %v440
      %vm510 = vcmp.eq.f32.partialorder %v400, %v444
      %vm511 = vcmp.eq.f32.partialorder %v400, %v448
      %vm512 = vcmp.eq.f32.partialorder %v400, %v452
      %vm513 = vcmp.eq.f32.partialorder %v400, %v456
      %vm514 = vcmp.eq.f32.partialorder %v400, %v460
      %vm515 = vcmp.eq.f32.partialorder %v400, %v464
      %vm516 = vcmp.eq.f32.partialorder %v400, %v468
      %vm517 = vcmp.lt.s32.totalorder %v74, %v402
      %v518 = vsel %vm517, 1, 0
      %v519 = vlaneseq
      %v520 = vshrl.u32 %v519, 7
      %v521 = vsub.s32 0, %v520
      %v522 = vrot.slane %v518, %v521
      %524 = vbcast.lane.b32.xlu0 %v522, 256
      %v525 = vpop.permute.xlu0 %524
      %v526 = vlaneseq
      %v527 = vshrl.u32 %v526, 7
      %v528 = vsub.s32 1, %v527
      %v529 = vrot.slane %v518, %v528
      %531 = vbcast.lane.b32.xlu0 %v529, 256
      %v532 = vpop.permute.xlu0 %531
      %v533 = vlaneseq
      %v534 = vshrl.u32 %v533, 7
      %v535 = vsub.s32 2, %v534
      %v536 = vrot.slane %v518, %v535
      %538 = vbcast.lane.b32.xlu0 %v536, 256
      %v539 = vpop.permute.xlu0 %538
      %v540 = vlaneseq
      %v541 = vshrl.u32 %v540, 7
      %v542 = vsub.s32 3, %v541
      %v543 = vrot.slane %v518, %v542
      %545 = vbcast.lane.b32.xlu0 %v543, 256
      %v546 = vpop.permute.xlu0 %545
      %v547 = vlaneseq
      %v548 = vshrl.u32 %v547, 7
      %v549 = vsub.s32 4, %v548
      %v550 = vrot.slane %v518, %v549
      %552 = vbcast.lane.b32.xlu0 %v550, 256
      %v553 = vpop.permute.xlu0 %552
      %v554 = vlaneseq
      %v555 = vshrl.u32 %v554, 7
      %v556 = vsub.s32 5, %v555
      %v557 = vrot.slane %v518, %v556
      %559 = vbcast.lane.b32.xlu0 %v557, 256
      %v560 = vpop.permute.xlu0 %559
      %v561 = vlaneseq
      %v562 = vshrl.u32 %v561, 7
      %v563 = vsub.s32 6, %v562
      %v564 = vrot.slane %v518, %v563
      %566 = vbcast.lane.b32.xlu0 %v564, 256
      %v567 = vpop.permute.xlu0 %566
      %v568 = vlaneseq
      %v569 = vshrl.u32 %v568, 7
      %v570 = vsub.s32 7, %v569
      %v571 = vrot.slane %v518, %v570
      %573 = vbcast.lane.b32.xlu0 %v571, 256
      %v574 = vpop.permute.xlu0 %573
      %vm575 = vcmp.ne.s32.totalorder %v525, 0
      %vm576 = vcmp.ne.s32.totalorder %v532, 0
      %vm577 = vcmp.ne.s32.totalorder %v539, 0
      %vm578 = vcmp.ne.s32.totalorder %v546, 0
      %vm579 = vcmp.ne.s32.totalorder %v553, 0
      %vm580 = vcmp.ne.s32.totalorder %v560, 0
      %vm581 = vcmp.ne.s32.totalorder %v567, 0
      %vm582 = vcmp.ne.s32.totalorder %v574, 0
      %vm583 = vmand %vm501, %vm575
      %vm584 = vmand %vm502, %vm576
      %vm585 = vmand %vm503, %vm577
      %vm586 = vmand %vm504, %vm578
      %vm587 = vmand %vm505, %vm579
      %vm588 = vmand %vm506, %vm580
      %vm589 = vmand %vm507, %vm581
      %vm590 = vmand %vm508, %vm582
      %vm591 = vmand %vm509, %vm575
      %vm592 = vmand %vm510, %vm576
      %vm593 = vmand %vm511, %vm577
      %vm594 = vmand %vm512, %vm578
      %vm595 = vmand %vm513, %vm579
      %vm596 = vmand %vm514, %vm580
      %vm597 = vmand %vm515, %vm581
      %vm598 = vmand %vm516, %vm582
      %vm599 = vmor %vm485, %vm583
      %vm600 = vmor %vm486, %vm584
      %vm601 = vmor %vm487, %vm585
      %vm602 = vmor %vm488, %vm586
      %vm603 = vmor %vm489, %vm587
      %vm604 = vmor %vm490, %vm588
      %vm605 = vmor %vm491, %vm589
      %vm606 = vmor %vm492, %vm590
      %vm607 = vmor %vm493, %vm591
      %vm608 = vmor %vm494, %vm592
      %vm609 = vmor %vm495, %vm593
      %vm610 = vmor %vm496, %vm594
      %vm611 = vmor %vm497, %vm595
      %vm612 = vmor %vm498, %vm596
      %vm613 = vmor %vm499, %vm597
      %vm614 = vmor %vm500, %vm598
      %v615 = vsel %vm599, 1, 0
      %v616 = vsel %vm600, 1, 0
      %v617 = vsel %vm601, 1, 0
      %v618 = vsel %vm602, 1, 0
      %v619 = vsel %vm603, 1, 0
      %v620 = vsel %vm604, 1, 0
      %v621 = vsel %vm605, 1, 0
      %v622 = vsel %vm606, 1, 0
      %v623 = vsel %vm607, 1, 0
      %v624 = vsel %vm608, 1, 0
      %v625 = vsel %vm609, 1, 0
      %v626 = vsel %vm610, 1, 0
      %v627 = vsel %vm611, 1, 0
      %v628 = vsel %vm612, 1, 0
      %v629 = vsel %vm613, 1, 0
      %v630 = vsel %vm614, 1, 0
      %631 = vset.pattern.permute.xlu0 0
      %632 = vperm.xlu0 %631, %v615
      %v633 = vpop.permute.xlu0 %632
      %634 = vset.pattern.permute.xlu0 0
      %635 = vperm.xlu0 %634, %v616
      %v636 = vpop.permute.xlu0 %635
      %637 = vset.pattern.permute.xlu0 0
      %638 = vperm.xlu0 %637, %v617
      %v639 = vpop.permute.xlu0 %638
      %640 = vset.pattern.permute.xlu0 0
      %641 = vperm.xlu0 %640, %v618
      %v642 = vpop.permute.xlu0 %641
      %643 = vset.pattern.permute.xlu0 0
      %644 = vperm.xlu0 %643, %v619
      %v645 = vpop.permute.xlu0 %644
      %646 = vset.pattern.permute.xlu0 0
      %647 = vperm.xlu0 %646, %v620
      %v648 = vpop.permute.xlu0 %647
      %649 = vset.pattern.permute.xlu0 0
      %650 = vperm.xlu0 %649, %v621
      %v651 = vpop.permute.xlu0 %650
      %652 = vset.pattern.permute.xlu0 0
      %653 = vperm.xlu0 %652, %v622
      %v654 = vpop.permute.xlu0 %653
      %655 = vset.pattern.permute.xlu0 0
      %656 = vperm.xlu0 %655, %v623
      %v657 = vpop.permute.xlu0 %656
      %658 = vset.pattern.permute.xlu0 0
      %659 = vperm.xlu0 %658, %v624
      %v660 = vpop.permute.xlu0 %659
      %661 = vset.pattern.permute.xlu0 0
      %662 = vperm.xlu0 %661, %v625
      %v663 = vpop.permute.xlu0 %662
      %664 = vset.pattern.permute.xlu0 0
      %665 = vperm.xlu0 %664, %v626
      %v666 = vpop.permute.xlu0 %665
      %667 = vset.pattern.permute.xlu0 0
      %668 = vperm.xlu0 %667, %v627
      %v669 = vpop.permute.xlu0 %668
      %670 = vset.pattern.permute.xlu0 0
      %671 = vperm.xlu0 %670, %v628
      %v672 = vpop.permute.xlu0 %671
      %673 = vset.pattern.permute.xlu0 0
      %674 = vperm.xlu0 %673, %v629
      %v675 = vpop.permute.xlu0 %674
      %676 = vset.pattern.permute.xlu0 0
      %677 = vperm.xlu0 %676, %v630
      %v678 = vpop.permute.xlu0 %677
      %v679 = vlaneseq
      %v680 = vshrl.u32 %v679, 7
      %v681 = vsub.s32 %v74, %v680
      %v682 = vrot.slane %v633, %v681
      %v683 = vlaneseq
      %v684 = vshrl.u32 %v683, 7
      %v685 = vsub.s32 %v74, %v684
      %v686 = vrot.slane %v636, %v685
      %v687 = vlaneseq
      %v688 = vshrl.u32 %v687, 7
      %v689 = vsub.s32 %v74, %v688
      %v690 = vrot.slane %v639, %v689
      %v691 = vlaneseq
      %v692 = vshrl.u32 %v691, 7
      %v693 = vsub.s32 %v74, %v692
      %v694 = vrot.slane %v642, %v693
      %v695 = vlaneseq
      %v696 = vshrl.u32 %v695, 7
      %v697 = vsub.s32 %v74, %v696
      %v698 = vrot.slane %v645, %v697
      %v699 = vlaneseq
      %v700 = vshrl.u32 %v699, 7
      %v701 = vsub.s32 %v74, %v700
      %v702 = vrot.slane %v648, %v701
      %v703 = vlaneseq
      %v704 = vshrl.u32 %v703, 7
      %v705 = vsub.s32 %v74, %v704
      %v706 = vrot.slane %v651, %v705
      %v707 = vlaneseq
      %v708 = vshrl.u32 %v707, 7
      %v709 = vsub.s32 %v74, %v708
      %v710 = vrot.slane %v654, %v709
      %v711 = vlaneseq
      %v712 = vshrl.u32 %v711, 7
      %v713 = vsub.s32 %v74, %v712
      %v714 = vrot.slane %v657, %v713
      %v715 = vlaneseq
      %v716 = vshrl.u32 %v715, 7
      %v717 = vsub.s32 %v74, %v716
      %v718 = vrot.slane %v660, %v717
      %v719 = vlaneseq
      %v720 = vshrl.u32 %v719, 7
      %v721 = vsub.s32 %v74, %v720
      %v722 = vrot.slane %v663, %v721
      %v723 = vlaneseq
      %v724 = vshrl.u32 %v723, 7
      %v725 = vsub.s32 %v74, %v724
      %v726 = vrot.slane %v666, %v725
      %v727 = vlaneseq
      %v728 = vshrl.u32 %v727, 7
      %v729 = vsub.s32 %v74, %v728
      %v730 = vrot.slane %v669, %v729
      %v731 = vlaneseq
      %v732 = vshrl.u32 %v731, 7
      %v733 = vsub.s32 %v74, %v732
      %v734 = vrot.slane %v672, %v733
      %v735 = vlaneseq
      %v736 = vshrl.u32 %v735, 7
      %v737 = vsub.s32 %v74, %v736
      %v738 = vrot.slane %v675, %v737
      %v739 = vlaneseq
      %v740 = vshrl.u32 %v739, 7
      %v741 = vsub.s32 %v74, %v740
      %v742 = vrot.slane %v678, %v741
      %v743 = vsel %vm83, %v686, %v682
      %v744 = vsel %vm362, %v690, %v743
      %v745 = vsel %vm364, %v694, %v744
      %v746 = vsel %vm366, %v698, %v745
      %v747 = vsel %vm368, %v702, %v746
      %v748 = vsel %vm370, %v706, %v747
      %v749 = vsel %vm372, %v710, %v748
      %v750 = vsel %vm83, %v718, %v714
      %v751 = vsel %vm362, %v722, %v750
      %v752 = vsel %vm364, %v726, %v751
      %v753 = vsel %vm366, %v730, %v752
      %v754 = vsel %vm368, %v734, %v753
      %v755 = vsel %vm370, %v738, %v754
      %v756 = vsel %vm372, %v742, %v755
      %v757 = vsel %vm131, %v749, 0
      %v758 = vand.u32 %v757, 65535
      %v759 = vshrl.u32 %v757, 16
      %v760 = vcvt.s32.f32 %v758
      %v761 = vcvt.s32.f32 %v759
      %762 = vadd.xlane.f32.xlu0 %v760
      %v763 = vpop.xlane.xlu0 %762
      %764 = vadd.xlane.f32.xlu0 %v761
      %v765 = vpop.xlane.xlu0 %764
      %v766 = vcvt.f32.s32 %v763
      %v767 = vcvt.f32.s32 %v765
      %v768 = vshll.u32 %v767, 16
      %v769 = vadd.s32 %v768, %v766
      %v770 = vsel %vm131, %v756, 0
      %v771 = vand.u32 %v770, 65535
      %v772 = vshrl.u32 %v770, 16
      %v773 = vcvt.s32.f32 %v771
      %v774 = vcvt.s32.f32 %v772
      %775 = vadd.xlane.f32.xlu0 %v773
      %v776 = vpop.xlane.xlu0 %775
      %777 = vadd.xlane.f32.xlu0 %v774
      %v778 = vpop.xlane.xlu0 %777
      %v779 = vcvt.f32.s32 %v776
      %v780 = vcvt.f32.s32 %v778
      %v781 = vshll.u32 %v780, 16
      %v782 = vadd.s32 %v781, %v779
      %v783 = vlaneseq
      %v784 = vshrl.u32 %v783, 7
      %v785 = vsub.s32 %v74, %v784
      %v786 = vrot.slane %v769, %v785
      %v787 = vlaneseq
      %v788 = vshrl.u32 %v787, 7
      %v789 = vsub.s32 %v74, %v788
      %v790 = vrot.slane %v782, %v789
      %v791 = vsel %vm362, %v786, %v786
      %v792 = vsel %vm364, %v786, %v791
      %v793 = vsel %vm366, %v786, %v792
      %v794 = vsel %vm368, %v786, %v793
      %v795 = vsel %vm370, %v786, %v794
      %v796 = vsel %vm372, %v786, %v795
      %v797 = vsel %vm362, %v790, %v790
      %v798 = vsel %vm364, %v790, %v797
      %v799 = vsel %vm366, %v790, %v798
      %v800 = vsel %vm368, %v790, %v799
      %v801 = vsel %vm370, %v790, %v800
      %v802 = vsel %vm372, %v790, %v801
      %vm803 = vcmp.eq.s32.totalorder %v402, %v796
      %vm804 = vcmp.eq.s32.totalorder %v402, %v802
      %v805 = vlaneseq
      %v806 = vshrl.u32 %v805, 7
      %v807 = vsub.s32 %v74, %v806
      %v808 = vrot.slane %v398, %v807
      %v809 = vlaneseq
      %v810 = vshrl.u32 %v809, 7
      %v811 = vsub.s32 %v74, %v810
      %v812 = vrot.slane %v400, %v811
      %v813 = vsel %vm362, %v808, %v808
      %v814 = vsel %vm364, %v808, %v813
      %v815 = vsel %vm366, %v808, %v814
      %v816 = vsel %vm368, %v808, %v815
      %v817 = vsel %vm370, %v808, %v816
      %v818 = vsel %vm372, %v808, %v817
      %v819 = vsel %vm362, %v812, %v812
      %v820 = vsel %vm364, %v812, %v819
      %v821 = vsel %vm366, %v812, %v820
      %v822 = vsel %vm368, %v812, %v821
      %v823 = vsel %vm370, %v812, %v822
      %v824 = vsel %vm372, %v812, %v823
      %v827 = vsel %vm803, %v818, 0.0
      %v828 = vsel %vm804, %v824, 0.0
      %829 = vst.msk [vmem:[#allocation9] sm:$0xff] %vm131, %v827
      %830 = vst.msk [vmem:[#allocation9 + $0x8] sm:$0xff] %vm131, %v828
    $region33: #{tpu_custom_call.1} parent=1 // pred_fallthru
      _
    // Predicated region
    $region34: #{tpu_custom_call.1} parent=1 // pred_check
      _
    $region35: #{tpu_custom_call.1} parent=1 // pred_check_branch
      %832 = sbr.rel (0) target = $region37
    $region36: #{tpu_custom_call.1} parent=1 // pred_region
      %s834 = ssub.s32 256, 256
      %835 = vsyncadd [#allocation5], %s834
      %s836 = sshll.u32 [#allocation9], 4
      %s837 = int_to_ptr.vmem [resolvable:$true] %s836
      %842 = dma.vmem_to_hbm [thread:$0]  %s837, 256, %s3, [#allocation5], 128, 128, 8
    $region37: #{tpu_custom_call.1} parent=1 // pred_fallthru
      _
    // Predicated region
    $region38: #{tpu_custom_call.1} parent=1 // pred_check
      _
    $region39: #{tpu_custom_call.1} parent=1 // pred_check_branch
      %844 = sbr.rel (0) target = $region41
    $region40: #{tpu_custom_call.1} parent=1 // pred_region
      %845 = dma.done [#allocation5], 256
    $region41: #{tpu_custom_call.1} parent=1 // pred_fallthru
      _
    %846 = vsyncpa [#allocation4], 1
    %847 = vsyncpa [#allocation7], 1
    %848 = vsyncpa [#allocation5], 1

</llo_original>
